<compile_context>
chip_gen: v5e
topology: v5e:2x2
jax: 0.10.0
libtpu: 0.0.40
codegen_flags: <defaults>
</compile_context>

<pallas_src>
from functools import partial

import numpy as np
import jax
import jax.numpy as jnp
from jax.experimental import pallas as pl
from jax.experimental.pallas import tpu as pltpu

EPS = 1e-5          # MinkowskiBatchNorm default eps
NEG_SLOPE = 0.01    # MinkowskiLeakyReLU default negative_slope
LANE = 128
SUBLANE = 8


def _round_up(x, m):
    return ((x + m - 1) // m) * m


def _choose_tiling(n_out, tile_n):
    """Pick row tile so the tile count is >=2 (and even when possible) for
    v7x megacore, while keeping tiles <= tile_n and sublane-aligned."""
    if n_out <= SUBLANE:
        return SUBLANE, SUBLANE, 1
    n_t = max(2, pl.cdiv(n_out, tile_n))
    if n_t % 2:
        n_t += 1
    tile = _round_up(pl.cdiv(n_out, n_t), SUBLANE)
    n_pad = _round_up(n_out, tile)
    return tile, n_pad, n_pad // tile


# ---------------- pass 1: sparse conv (MXU matmul) + per-tile BN partials -----
def conv_stats_kernel(g_ref, w_ref, y_ref, sum_ref, sq_ref):
    c_out = y_ref.shape[-1]
    # bf16 operands, f32 accumulation on the MXU.
    y_full = jnp.dot(g_ref[...], w_ref[...], preferred_element_type=jnp.float32)
    y = y_full[:, :c_out]                     # true-width conv result (tile, C_out)
    y_ref[...] = y
    # Single-pass partial statistics for this tile (padded rows are all-zero
    # and therefore contribute nothing).
    sum_ref[...] = jnp.sum(y, axis=0, keepdims=True)[None]     # (1, 1, C_out)
    sq_ref[...] = jnp.sum(y * y, axis=0, keepdims=True)[None]  # (1, 1, C_out)


# ---------------- pass 2: in-kernel BN fold (scale/bias) + LeakyReLU ----------
def bn_lrelu_kernel(cnt_ref, gamma_ref, beta_ref, psum_ref, psq_ref, y_ref, o_ref):
    inv_n = 1.0 / jnp.maximum(cnt_ref[0], 1.0)                  # SMEM scalar
    mean = jnp.sum(psum_ref[...], axis=0) * inv_n               # (1, C_out)
    var = jnp.sum(psq_ref[...], axis=0) * inv_n - mean * mean   # biased (training)
    scale = gamma_ref[...] * jax.lax.rsqrt(var + EPS)
    bias = beta_ref[...] - mean * scale
    z = y_ref[...] * scale + bias
    o_ref[...] = jnp.where(z > 0, z, NEG_SLOPE * z)


@partial(jax.jit, static_argnames=("tile_n",))
def sparse_conv_block(feats, nbr, weights, gamma, beta, *, tile_n=1024):
    """LeakyReLU(BatchNorm(SparseConv(feats))) over the n_out output points
    described by the kernel map `nbr` (K, n_out); training-mode (biased) batch
    statistics over the real output points.

    feats   : (n_in, C_in) f32 input features
    nbr     : (K, n_out) int32 kernel map (index into feats, -1 = missing)
    weights : (K, C_in, C_out) conv weights (MinkowskiConvolution, no bias)
    gamma, beta : (1, C_out) BN affine parameters
    """
    n_in, c_in = feats.shape
    K, _, c_out = weights.shape
    n_out = nbr.shape[1]
    kc = K * c_in

    kc_pad = _round_up(kc, LANE)     # lane-dense contraction dim for the MXU
    c_pad = _round_up(c_out, LANE)   # lane-dense weight operand (output sliced)
    tile, n_pad, n_tiles = _choose_tiling(n_out, tile_n)

    # --- neighbor gather: one fused XLA op straight into the padded bf16
    # MXU operand (no f32 g_flat + recast round-trip).
    # TODO(synk): move this gather in-kernel (scalar-prefetch nbr + DMA row
    # gather) to also drop this HBM write of the widest tensor.
    safe = jnp.clip(nbr, 0, n_in - 1)
    gathered = jnp.where((nbr >= 0)[..., None],
                         feats.astype(jnp.bfloat16)[safe], 0.0)     # (K, n_out, C_in)
    g_flat = jnp.transpose(gathered, (1, 0, 2)).reshape(n_out, kc)
    g = jnp.zeros((n_pad, kc_pad), jnp.bfloat16).at[:n_out, :kc].set(g_flat)
    w = jnp.zeros((kc_pad, c_pad), jnp.bfloat16).at[:kc, :c_out].set(
        weights.reshape(kc, c_out).astype(jnp.bfloat16))

    flops1 = 2 * n_pad * kc_pad * c_pad
    bytes1 = (n_pad * kc_pad * 2 + kc_pad * c_pad * 2
              + n_pad * c_out * 4 + 2 * n_tiles * c_out * 4)

    y, psum, psq = pl.pallas_call(
        conv_stats_kernel,
        out_shape=(
            jax.ShapeDtypeStruct((n_pad, c_out), jnp.float32),      # true width
            jax.ShapeDtypeStruct((n_tiles, 1, c_out), jnp.float32),
            jax.ShapeDtypeStruct((n_tiles, 1, c_out), jnp.float32),
        ),
        grid=(n_tiles,),
        in_specs=[
            pl.BlockSpec((tile, kc_pad), lambda i: (i, 0)),
            pl.BlockSpec((kc_pad, c_pad), lambda i: (0, 0)),        # stays resident
        ],
        out_specs=(
            pl.BlockSpec((tile, c_out), lambda i: (i, 0)),
            pl.BlockSpec((1, 1, c_out), lambda i: (i, 0, 0)),
            pl.BlockSpec((1, 1, c_out), lambda i: (i, 0, 0)),
        ),
        compiler_params=pltpu.CompilerParams(
            dimension_semantics=("parallel",),
            vmem_limit_bytes=32 * 1024 * 1024),
        cost_estimate=pl.CostEstimate(
            flops=flops1, transcendentals=0, bytes_accessed=bytes1),
    )(g, w)

    # n_true as an SMEM scalar: only real rows count in the BN denominator.
    cnt = jnp.asarray([n_out], dtype=jnp.float32)

    flops2 = 10 * n_pad * c_out
    bytes2 = 2 * n_pad * c_out * 4 + 2 * n_tiles * c_out * 4 + 5 * c_out * 4

    out = pl.pallas_call(
        bn_lrelu_kernel,
        out_shape=jax.ShapeDtypeStruct((n_pad, c_out), jnp.float32),
        grid=(n_tiles,),
        in_specs=[
            pl.BlockSpec(memory_space=pltpu.MemorySpace.SMEM),       # n_true
            pl.BlockSpec((1, c_out), lambda i: (0, 0)),              # gamma
            pl.BlockSpec((1, c_out), lambda i: (0, 0)),              # beta
            pl.BlockSpec((n_tiles, 1, c_out), lambda i: (0, 0, 0)),  # partial sums
            pl.BlockSpec((n_tiles, 1, c_out), lambda i: (0, 0, 0)),  # partial sumsq
            pl.BlockSpec((tile, c_out), lambda i: (i, 0)),           # conv result
        ],
        out_specs=pl.BlockSpec((tile, c_out), lambda i: (i, 0)),
        compiler_params=pltpu.CompilerParams(
            dimension_semantics=("parallel",),
            vmem_limit_bytes=32 * 1024 * 1024),
        cost_estimate=pl.CostEstimate(
            flops=flops2, transcendentals=c_out * n_tiles, bytes_accessed=bytes2),
    )(cnt, gamma.astype(jnp.float32), beta.astype(jnp.float32), psum, psq, y)

    return out[:n_out]     # drop padded rows only; channels already true width


def build_kernel_map(in_coords, stride, kernel_size, dimension=3):
    """Glue (host-side): MinkowskiEngine-style kernel map.
    Output coords = input coords quantized to the new tensor stride.
    nbr[k, j] = index of the input point at out_coord[j] + offset[k], or -1.
    """
    in_coords = np.asarray(in_coords)
    out_coords = np.unique((in_coords // stride) * stride, axis=0)
    half = kernel_size // 2
    offs = np.array(
        np.meshgrid(*([np.arange(-half, half + 1)] * dimension), indexing="ij")
    ).reshape(dimension, -1).T
    lut = {tuple(c): i for i, c in enumerate(in_coords)}
    K, n_out = offs.shape[0], out_coords.shape[0]
    nbr = -np.ones((K, n_out), dtype=np.int32)
    for k, d in enumerate(offs):
        for j, o in enumerate(out_coords):
            nbr[k, j] = lut.get(tuple(o + d), -1)
    return out_coords, nbr


if __name__ == "__main__":
    # SparseConvBlock(in_channel=4, out_channel=8, kernel_size=3, stride=2, dimension=3)
    in_channel, out_channel, kernel_size, stride, dimension = 4, 8, 3, 2, 3
    K = kernel_size ** dimension  # 27 kernel offsets

    # Deterministic sparse coordinate pattern: 64 points inside an 8^3 grid
    coords = np.array(
        [(x, y, z) for y in range(8) for z in range(8) for x in range(8)
         if (x + 2 * y + 3 * z) % 8 == 0],
        dtype=np.int32,
    )
    n_in = coords.shape[0]

    key = jax.random.PRNGKey(0)
    kf, kw = jax.random.split(key)
    feats = jax.random.normal(kf, (n_in, in_channel), dtype=jnp.float32)
    weights = 0.1 * jax.random.normal(kw, (K, in_channel, out_channel),
                                      dtype=jnp.float32)
    gamma = jnp.ones((1, out_channel), dtype=jnp.float32)   # BN weight
    beta = jnp.zeros((1, out_channel), dtype=jnp.float32)   # BN bias

    # TODO(synk): coordinate hashing / kernel-map construction has no clean
    # Pallas equivalent (host-side NumPy, like MinkowskiEngine's CPU coord map).
    out_coords, nbr = build_kernel_map(coords, stride, kernel_size, dimension)
    n_out = out_coords.shape[0]
    nbr_j = jnp.asarray(nbr)

    out = sparse_conv_block(feats, nbr_j, weights, gamma, beta)
    jax.block_until_ready(out)
    assert out.shape == (n_out, out_channel)

    # Pure-JAX f32 reference (conv -> training-mode BN -> LeakyReLU); the
    # kernel uses bf16 MXU operands with f32 accumulation, hence the tolerance.
    valid = (nbr_j >= 0)[..., None]
    gath = jnp.where(valid, feats[jnp.clip(nbr_j, 0, n_in - 1)], 0.0)
    g_ref = jnp.transpose(gath, (1, 0, 2)).reshape(n_out, K * in_channel)
    y_ref = g_ref @ weights.reshape(K * in_channel, out_channel)
    mean, var = y_ref.mean(axis=0), y_ref.var(axis=0)
    z = (y_ref - mean) * jax.lax.rsqrt(var + EPS) * gamma + beta
    ref = jnp.where(z > 0, z, NEG_SLOPE * z)
    np.testing.assert_allclose(np.asarray(out), np.asarray(ref), atol=5e-2, rtol=0)

    print("KERNEL_OK")
</pallas_src>

<mosaic_0001>
module attributes {stable_mosaic.version = 11 : i64} {
  func.func @conv_stats_kernel(%arg0: i32, %arg1: memref<32x128xbf16, #tpu.memory_space<vmem>>, %arg2: memref<128x128xbf16, #tpu.memory_space<vmem>>, %arg3: memref<32x8xf32, #tpu.memory_space<vmem>>, %arg4: memref<1x1x8xf32, #tpu.memory_space<vmem>>, %arg5: memref<1x1x8xf32, #tpu.memory_space<vmem>>) attributes {dimension_semantics = [#tpu.dimension_semantics<parallel>], iteration_bounds = array<i64: 2>, scalar_prefetch = 0 : i64, scratch_operands = 0 : i64, tpu.core_type = #tpu.core_type<tc>, window_params = [{transform_indices = @transform_0, window_bounds = array<i64: 32, 128>}, {pipeline_mode = #tpu.pipeline_mode<synchronous>, transform_indices = @transform_1, window_bounds = array<i64: 128, 128>}, {transform_indices = @transform_2, window_bounds = array<i64: 32, 8>}, {transform_indices = @transform_3, window_bounds = array<i64: 1, 1, 8>}, {transform_indices = @transform_4, window_bounds = array<i64: 1, 1, 8>}]} {
    %c0 = arith.constant 0 : index
    %c0_0 = arith.constant 0 : index
    %0 = vector.load %arg1[%c0, %c0_0] : memref<32x128xbf16, #tpu.memory_space<vmem>>, vector<32x128xbf16>
    %c0_1 = arith.constant 0 : index
    %c0_2 = arith.constant 0 : index
    %1 = vector.load %arg2[%c0_1, %c0_2] : memref<128x128xbf16, #tpu.memory_space<vmem>>, vector<128x128xbf16>
    %cst = arith.constant dense<0.000000e+00> : vector<32x128xf32>
    %2 = tpu.matmul %0, %1, %cst {dimension_numbers = #tpu.dot_dimension_numbers<[1], [0], [0], [1], [0, 0, 1, 1], [], []>} : vector<32x128xbf16>, vector<128x128xbf16>, vector<32x128xf32> -> vector<32x128xf32>
    %3 = vector.extract_strided_slice %2 {offsets = [0, 0], sizes = [32, 8], strides = [1, 1]} : vector<32x128xf32> to vector<32x8xf32>
    %c0_3 = arith.constant 0 : index
    %c0_4 = arith.constant 0 : index
    %4 = vector.load %arg3[%c0_3, %c0_4] : memref<32x8xf32, #tpu.memory_space<vmem>>, vector<32x8xf32>
    tpu.vector_store %arg3[%c0_3, %c0_4], %3 {strides = array<i32>} : memref<32x8xf32, #tpu.memory_space<vmem>>, vector<32x8xf32>,
    %cst_5 = arith.constant dense<0.000000e+00> : vector<8xf32>
    %5 = vector.multi_reduction <add>, %3, %cst_5 [0] : vector<32x8xf32> to vector<8xf32>
    %6 = vector.shape_cast %5 : vector<8xf32> to vector<1x8xf32>
    %7 = vector.shape_cast %6 : vector<1x8xf32> to vector<1x1x8xf32>
    %c0_6 = arith.constant 0 : index
    %c0_7 = arith.constant 0 : index
    %c0_8 = arith.constant 0 : index
    %8 = vector.load %arg4[%c0_6, %c0_7, %c0_8] : memref<1x1x8xf32, #tpu.memory_space<vmem>>, vector<1x1x8xf32>
    tpu.vector_store %arg4[%c0_6, %c0_7, %c0_8], %7 {strides = array<i32>} : memref<1x1x8xf32, #tpu.memory_space<vmem>>, vector<1x1x8xf32>,
    %9 = arith.mulf %3, %3 : vector<32x8xf32>
    %cst_9 = arith.constant dense<0.000000e+00> : vector<8xf32>
    %10 = vector.multi_reduction <add>, %9, %cst_9 [0] : vector<32x8xf32> to vector<8xf32>
    %11 = vector.shape_cast %10 : vector<8xf32> to vector<1x8xf32>
    %12 = vector.shape_cast %11 : vector<1x8xf32> to vector<1x1x8xf32>
    %c0_10 = arith.constant 0 : index
    %c0_11 = arith.constant 0 : index
    %c0_12 = arith.constant 0 : index
    %13 = vector.load %arg5[%c0_10, %c0_11, %c0_12] : memref<1x1x8xf32, #tpu.memory_space<vmem>>, vector<1x1x8xf32>
    tpu.vector_store %arg5[%c0_10, %c0_11, %c0_12], %12 {strides = array<i32>} : memref<1x1x8xf32, #tpu.memory_space<vmem>>, vector<1x1x8xf32>,
    return
  }
  func.func @transform_0(%arg0: i32) -> (i32, i32) {
    %c0_i32 = arith.constant 0 : i32
    %c0_i32_0 = arith.constant 0 : i32
    return %arg0, %c0_i32 : i32, i32
  }
  func.func @transform_1(%arg0: i32) -> (i32, i32) {
    %c0_i32 = arith.constant 0 : i32
    %c0_i32_0 = arith.constant 0 : i32
    %c0_i32_1 = arith.constant 0 : i32
    return %c0_i32, %c0_i32_0 : i32, i32
  }
  func.func @transform_2(%arg0: i32) -> (i32, i32) {
    %c0_i32 = arith.constant 0 : i32
    %c0_i32_0 = arith.constant 0 : i32
    return %arg0, %c0_i32 : i32, i32
  }
  func.func @transform_3(%arg0: i32) -> (i32, i32, i32) {
    %c0_i32 = arith.constant 0 : i32
    %c0_i32_0 = arith.constant 0 : i32
    %c0_i32_1 = arith.constant 0 : i32
    return %arg0, %c0_i32, %c0_i32_0 : i32, i32, i32
  }
  func.func @transform_4(%arg0: i32) -> (i32, i32, i32) {
    %c0_i32 = arith.constant 0 : i32
    %c0_i32_0 = arith.constant 0 : i32
    %c0_i32_1 = arith.constant 0 : i32
    return %arg0, %c0_i32, %c0_i32_0 : i32, i32, i32
  }
}

module attributes {stable_mosaic.version = 11 : i64} {
  func.func @bn_lrelu_kernel(%arg0: i32, %arg1: memref<1xf32, #tpu.memory_space<smem>>, %arg2: memref<1x8xf32, #tpu.memory_space<vmem>>, %arg3: memref<1x8xf32, #tpu.memory_space<vmem>>, %arg4: memref<2x1x8xf32, #tpu.memory_space<vmem>>, %arg5: memref<2x1x8xf32, #tpu.memory_space<vmem>>, %arg6: memref<32x8xf32, #tpu.memory_space<vmem>>, %arg7: memref<32x8xf32, #tpu.memory_space<vmem>>) attributes {dimension_semantics = [#tpu.dimension_semantics<parallel>], iteration_bounds = array<i64: 2>, scalar_prefetch = 0 : i64, scratch_operands = 0 : i64, tpu.core_type = #tpu.core_type<tc>, window_params = [{transform_indices = @transform_0, window_bounds = array<i64: 1>}, {pipeline_mode = #tpu.pipeline_mode<synchronous>, transform_indices = @transform_1, window_bounds = array<i64: 1, 8>}, {pipeline_mode = #tpu.pipeline_mode<synchronous>, transform_indices = @transform_2, window_bounds = array<i64: 1, 8>}, {pipeline_mode = #tpu.pipeline_mode<synchronous>, transform_indices = @transform_3, window_bounds = array<i64: 2, 1, 8>}, {pipeline_mode = #tpu.pipeline_mode<synchronous>, transform_indices = @transform_4, window_bounds = array<i64: 2, 1, 8>}, {transform_indices = @transform_5, window_bounds = array<i64: 32, 8>}, {transform_indices = @transform_6, window_bounds = array<i64: 32, 8>}]} {
    %c0 = arith.constant 0 : index
    %0 = memref.load %arg1[%c0] : memref<1xf32, #tpu.memory_space<smem>>
    %cst = arith.constant 1.000000e+00 : f32
    %1 = arith.maximumf %0, %cst : f32
    %cst_0 = arith.constant 1.000000e+00 : f32
    %2 = arith.divf %cst_0, %1 : f32
    %c0_1 = arith.constant 0 : index
    %c0_2 = arith.constant 0 : index
    %c0_3 = arith.constant 0 : index
    %3 = vector.load %arg4[%c0_1, %c0_2, %c0_3] : memref<2x1x8xf32, #tpu.memory_space<vmem>>, vector<2x1x8xf32>
    %cst_4 = arith.constant dense<0.000000e+00> : vector<1x8xf32>
    %4 = vector.multi_reduction <add>, %3, %cst_4 [0] : vector<2x1x8xf32> to vector<1x8xf32>
    %5 = vector.broadcast %2 : f32 to vector<1x8xf32>
    %6 = arith.mulf %4, %5 : vector<1x8xf32>
    %c0_5 = arith.constant 0 : index
    %c0_6 = arith.constant 0 : index
    %c0_7 = arith.constant 0 : index
    %7 = vector.load %arg5[%c0_5, %c0_6, %c0_7] : memref<2x1x8xf32, #tpu.memory_space<vmem>>, vector<2x1x8xf32>
    %cst_8 = arith.constant dense<0.000000e+00> : vector<1x8xf32>
    %8 = vector.multi_reduction <add>, %7, %cst_8 [0] : vector<2x1x8xf32> to vector<1x8xf32>
    %9 = vector.broadcast %2 : f32 to vector<1x8xf32>
    %10 = arith.mulf %8, %9 : vector<1x8xf32>
    %11 = arith.mulf %6, %6 : vector<1x8xf32>
    %12 = arith.subf %10, %11 : vector<1x8xf32>
    %c0_9 = arith.constant 0 : index
    %c0_10 = arith.constant 0 : index
    %13 = vector.load %arg2[%c0_9, %c0_10] : memref<1x8xf32, #tpu.memory_space<vmem>>, vector<1x8xf32>
    %cst_11 = arith.constant 9.99999974E-6 : f32
    %14 = vector.broadcast %cst_11 : f32 to vector<1x8xf32>
    %15 = arith.addf %12, %14 : vector<1x8xf32>
    %16 = math.rsqrt %15 : vector<1x8xf32>
    %17 = arith.mulf %13, %16 : vector<1x8xf32>
    %c0_12 = arith.constant 0 : index
    %c0_13 = arith.constant 0 : index
    %18 = vector.load %arg3[%c0_12, %c0_13] : memref<1x8xf32, #tpu.memory_space<vmem>>, vector<1x8xf32>
    %19 = arith.mulf %6, %17 : vector<1x8xf32>
    %20 = arith.subf %18, %19 : vector<1x8xf32>
    %c0_14 = arith.constant 0 : index
    %c0_15 = arith.constant 0 : index
    %21 = vector.load %arg6[%c0_14, %c0_15] : memref<32x8xf32, #tpu.memory_space<vmem>>, vector<32x8xf32>
    %22 = vector.broadcast %17 : vector<1x8xf32> to vector<32x8xf32>
    %23 = arith.mulf %21, %22 : vector<32x8xf32>
    %24 = vector.broadcast %20 : vector<1x8xf32> to vector<32x8xf32>
    %25 = arith.addf %23, %24 : vector<32x8xf32>
    %cst_16 = arith.constant 0.000000e+00 : f32
    %26 = vector.broadcast %cst_16 : f32 to vector<32x8xf32>
    %27 = arith.cmpf ogt, %25, %26 : vector<32x8xf32>
    %cst_17 = arith.constant 0.00999999977 : f32
    %28 = vector.broadcast %cst_17 : f32 to vector<32x8xf32>
    %29 = arith.mulf %28, %25 : vector<32x8xf32>
    %30 = arith.select %27, %25, %29 : vector<32x8xi1>, vector<32x8xf32>
    %c0_18 = arith.constant 0 : index
    %c0_19 = arith.constant 0 : index
    %31 = vector.load %arg7[%c0_18, %c0_19] : memref<32x8xf32, #tpu.memory_space<vmem>>, vector<32x8xf32>
    tpu.vector_store %arg7[%c0_18, %c0_19], %30 {strides = array<i32>} : memref<32x8xf32, #tpu.memory_space<vmem>>, vector<32x8xf32>,
    return
  }
  func.func @transform_0(%arg0: i32) -> i32 {
    %c0_i32 = arith.constant 0 : i32
    %c0_i32_0 = arith.constant 0 : i32
    return %c0_i32 : i32
  }
  func.func @transform_1(%arg0: i32) -> (i32, i32) {
    %c0_i32 = arith.constant 0 : i32
    %c0_i32_0 = arith.constant 0 : i32
    %c0_i32_1 = arith.constant 0 : i32
    return %c0_i32, %c0_i32_0 : i32, i32
  }
  func.func @transform_2(%arg0: i32) -> (i32, i32) {
    %c0_i32 = arith.constant 0 : i32
    %c0_i32_0 = arith.constant 0 : i32
    %c0_i32_1 = arith.constant 0 : i32
    return %c0_i32, %c0_i32_0 : i32, i32
  }
  func.func @transform_3(%arg0: i32) -> (i32, i32, i32) {
    %c0_i32 = arith.constant 0 : i32
    %c0_i32_0 = arith.constant 0 : i32
    %c0_i32_1 = arith.constant 0 : i32
    %c0_i32_2 = arith.constant 0 : i32
    return %c0_i32, %c0_i32_0, %c0_i32_1 : i32, i32, i32
  }
  func.func @transform_4(%arg0: i32) -> (i32, i32, i32) {
    %c0_i32 = arith.constant 0 : i32
    %c0_i32_0 = arith.constant 0 : i32
    %c0_i32_1 = arith.constant 0 : i32
    %c0_i32_2 = arith.constant 0 : i32
    return %c0_i32, %c0_i32_0, %c0_i32_1 : i32, i32, i32
  }
  func.func @transform_5(%arg0: i32) -> (i32, i32) {
    %c0_i32 = arith.constant 0 : i32
    %c0_i32_0 = arith.constant 0 : i32
    return %arg0, %c0_i32 : i32, i32
  }
  func.func @transform_6(%arg0: i32) -> (i32, i32) {
    %c0_i32 = arith.constant 0 : i32
    %c0_i32_0 = arith.constant 0 : i32
    return %arg0, %c0_i32 : i32, i32
  }
}

</mosaic_0001>

<llo_original>
// kernel: sparse_conv_block.2
$region0: #{sparse_conv_block.2}
  #allocation0 [shape = 'u32[]', space=smem, size = 0x4, offset = 0x4, fixed_abs, tag = 'smem constant byte address 0x4 - core index']
  #allocation1 [shape = 'u32[72,128]{1,0:T(1,128)}', space=vmem, size = 0x9000, scoped, tag = 'internal scratch']
  %s0 = inlined_call_operand.vmem [shape: bf16[64,128], index: 0, kind: input, shape index: {}]
  %s1 = inlined_call_operand.vmem [shape: bf16[128,128], index: 1, kind: input, shape index: {}]
  %s2 = inlined_call_operand.vmem [shape: f32[64,8], index: 2, kind: output, shape index: {0}]
  %s3 = inlined_call_operand.vmem [shape: f32[2,1,8], index: 3, kind: output, shape index: {1}]
  %s4 = inlined_call_operand.vmem [shape: f32[2,1,8], index: 4, kind: output, shape index: {2}]
  %5 = xla_tuple %s2, %s3, %s4
  %s6 = sld [smem:[#allocation0]]
  $region57: #{sparse_conv_block.2} parent=0
    _
  %s8 = ssub.s32 1, %s6
  %s9 = scalar_select 0, %s8, %s6
  loop: start=0, step=1, limit=4
  $region2: #{sparse_conv_block.2} parent=0 // loop_pre_header
    _
  $region3: #{sparse_conv_block.2} parent=0 // loop_header
    %s11 = sphi 0, %s15
    %p12 = scmp.ge.s32.totalorder %s11, 4
    %s21 = sphi 0, %s23
    %s24 = sphi 0, %s21
    %s25 = sphi 0, %s24
    %s41 = sphi 0, %s25
    %s45 = sphi 0, %s45
    %s47 = sphi 0, %s45
    %s48 = sphi 0, %s47
    %s62 = sphi 0, %s48
    %s68 = sphi 0, %s70
    %s71 = sphi 0, %s68
    %s72 = sphi 0, %s71
    %s88 = sphi 0, %s72
    %s94 = sphi 0, %s96
    %s97 = sphi 0, %s94
    %s98 = sphi 0, %s97
    %s114 = sphi 0, %s98
    %s120 = sphi 0, %s122
    %s123 = sphi 0, %s120
    %s124 = sphi 0, %s123
    %s140 = sphi 0, %s124
  $region4: #{sparse_conv_block.2} parent=0 // loop_header_branch
    %14 = sbr.rel (%p12) target = $region8
  $region5: #{sparse_conv_block.2} parent=0 // loop_body
    %s16 = ssub.s32 %s11, 1
    %s17 = ssub.s32 %s11, 2
    %s18 = sadd.s32 %s11, 1
    %s19 = ssub.s32 %s11, %s18
    %p20 = scmp.eq.s32.totalorder %s19, 0
    %s22 = sadd.s32 %s21, 1
    %s23 = scalar_select %p20, %s21, %s22
    %p26 = pneg %p20
    %p27 = scmp.eq.s32.totalorder %s11, 1
    %p28 = por %p26, %p27
    %p29 = scmp.ne.s32.totalorder %s21, %s24
    %p30 = scmp.eq.s32.totalorder %s11, 0
    %p31 = por %p29, %p30
    %p32 = scmp.ne.s32.totalorder %s21, %s24
    %p33 = scmp.eq.s32.totalorder %s16, 1
    %p34 = por %p32, %p33
    %p35 = scmp.ne.s32.totalorder %s24, %s25
    %p36 = scmp.eq.s32.totalorder %s16, 0
    %p37 = por %p35, %p36
    %p38 = scmp.ne.s32.totalorder %s24, %s25
    %p39 = scmp.eq.s32.totalorder %s17, 1
    %p40 = por %p38, %p39
    %p42 = scmp.ne.s32.totalorder %s25, %s41
    %p43 = scmp.eq.s32.totalorder %s17, 0
    %p44 = por %p42, %p43
    %s46 = sadd.s32 %s45, 1
    %p49 = scmp.eq.s32.totalorder %s11, 1
    %p50 = scmp.ne.s32.totalorder %s45, %s47
    %p51 = scmp.eq.s32.totalorder %s11, 0
    %p52 = por %p50, %p51
    %p53 = scmp.ne.s32.totalorder %s45, %s47
    %p54 = scmp.eq.s32.totalorder %s16, 1
    %p55 = por %p53, %p54
    %p56 = scmp.ne.s32.totalorder %s47, %s48
    %p57 = scmp.eq.s32.totalorder %s16, 0
    %p58 = por %p56, %p57
    %p59 = scmp.ne.s32.totalorder %s47, %s48
    %p60 = scmp.eq.s32.totalorder %s17, 1
    %p61 = por %p59, %p60
    %p63 = scmp.ne.s32.totalorder %s48, %s62
    %p64 = scmp.eq.s32.totalorder %s17, 0
    %p65 = por %p63, %p64
    %s66 = ssub.s32 %s11, %s18
    %p67 = scmp.eq.s32.totalorder %s66, 0
    %s69 = sadd.s32 %s68, 1
    %s70 = scalar_select %p67, %s68, %s69
    %p73 = pneg %p67
    %p74 = scmp.eq.s32.totalorder %s11, 1
    %p75 = por %p73, %p74
    %p76 = scmp.ne.s32.totalorder %s68, %s71
    %p77 = scmp.eq.s32.totalorder %s11, 0
    %p78 = por %p76, %p77
    %p79 = scmp.ne.s32.totalorder %s68, %s71
    %p80 = scmp.eq.s32.totalorder %s16, 1
    %p81 = por %p79, %p80
    %p82 = scmp.ne.s32.totalorder %s71, %s72
    %p83 = scmp.eq.s32.totalorder %s16, 0
    %p84 = por %p82, %p83
    %p85 = scmp.ne.s32.totalorder %s71, %s72
    %p86 = scmp.eq.s32.totalorder %s17, 1
    %p87 = por %p85, %p86
    %p89 = scmp.ne.s32.totalorder %s72, %s88
    %p90 = scmp.eq.s32.totalorder %s17, 0
    %p91 = por %p89, %p90
    %s92 = ssub.s32 %s11, %s18
    %p93 = scmp.eq.s32.totalorder %s92, 0
    %s95 = sadd.s32 %s94, 1
    %s96 = scalar_select %p93, %s94, %s95
    %p99 = pneg %p93
    %p100 = scmp.eq.s32.totalorder %s11, 1
    %p101 = por %p99, %p100
    %p102 = scmp.ne.s32.totalorder %s94, %s97
    %p103 = scmp.eq.s32.totalorder %s11, 0
    %p104 = por %p102, %p103
    %p105 = scmp.ne.s32.totalorder %s94, %s97
    %p106 = scmp.eq.s32.totalorder %s16, 1
    %p107 = por %p105, %p106
    %p108 = scmp.ne.s32.totalorder %s97, %s98
    %p109 = scmp.eq.s32.totalorder %s16, 0
    %p110 = por %p108, %p109
    %p111 = scmp.ne.s32.totalorder %s97, %s98
    %p112 = scmp.eq.s32.totalorder %s17, 1
    %p113 = por %p111, %p112
    %p115 = scmp.ne.s32.totalorder %s98, %s114
    %p116 = scmp.eq.s32.totalorder %s17, 0
    %p117 = por %p115, %p116
    %s118 = ssub.s32 %s11, %s18
    %p119 = scmp.eq.s32.totalorder %s118, 0
    %s121 = sadd.s32 %s120, 1
    %s122 = scalar_select %p119, %s120, %s121
    %p125 = pneg %p119
    %p126 = scmp.eq.s32.totalorder %s11, 1
    %p127 = por %p125, %p126
    %p128 = scmp.ne.s32.totalorder %s120, %s123
    %p129 = scmp.eq.s32.totalorder %s11, 0
    %p130 = por %p128, %p129
    %p131 = scmp.ne.s32.totalorder %s120, %s123
    %p132 = scmp.eq.s32.totalorder %s16, 1
    %p133 = por %p131, %p132
    %p134 = scmp.ne.s32.totalorder %s123, %s124
    %p135 = scmp.eq.s32.totalorder %s16, 0
    %p136 = por %p134, %p135
    %p137 = scmp.ne.s32.totalorder %s123, %s124
    %p138 = scmp.eq.s32.totalorder %s17, 1
    %p139 = por %p137, %p138
    %p141 = scmp.ne.s32.totalorder %s124, %s140
    %p142 = scmp.eq.s32.totalorder %s17, 0
    %p143 = por %p141, %p142
    %p144 = scmp.le.s32.totalorder 1, %s11
    %p145 = scmp.lt.s32.totalorder %s11, 3
    %p146 = pnand %p144, %p145
    %p147 = pneg %p146
    // Predicated region
    $region9: #{sparse_conv_block.2} parent=5 // pred_check
      _
    $region10: #{sparse_conv_block.2} parent=5 // pred_check_branch
      %149 = sbr.rel (%p146) target = $region12
    $region11: #{sparse_conv_block.2} parent=5 // pred_region
      %s150 = ssub.s32 %s11, 1
      // Predicated region
      $region13: #{sparse_conv_block.2} parent=11 // pred_check
        %p151 = pneg %p58
      $region14: #{sparse_conv_block.2} parent=11 // pred_check_branch
        %153 = sbr.rel (%p151) target = $region16
      $region15: #{sparse_conv_block.2} parent=11 // pred_region
        _
      $region16: #{sparse_conv_block.2} parent=11 // pred_fallthru
        _
    $region12: #{sparse_conv_block.2} parent=5 // pred_fallthru
      _
    %p154 = scmp.lt.s32.totalorder %s11, 2
    // Predicated region
    $region17: #{sparse_conv_block.2} parent=5 // pred_check
      %p155 = pneg %p154
    $region18: #{sparse_conv_block.2} parent=5 // pred_check_branch
      %157 = sbr.rel (%p155) target = $region20
    $region19: #{sparse_conv_block.2} parent=5 // pred_region
      // Predicated region
      $region21: #{sparse_conv_block.2} parent=19 // pred_check
        %p158 = pneg %p31
      $region22: #{sparse_conv_block.2} parent=19 // pred_check_branch
        %160 = sbr.rel (%p158) target = $region24
      $region23: #{sparse_conv_block.2} parent=19 // pred_region
        %s161 = smul.u32 4, %s11
        %p162 = scmp.lt.s32.totalorder %s161, 7
        %s163 = scalar_select %p162, %s161, 7
        %s164 = smul.addr %s163, 4
        %s165 = scalar_lea.vmem %s0, %s164
        %s166 = smul.u32 4, %s11
      $region24: #{sparse_conv_block.2} parent=19 // pred_fallthru
        _
    $region20: #{sparse_conv_block.2} parent=5 // pred_fallthru
      _
    %p167 = scmp.le.s32.totalorder 1, %s11
    %p168 = scmp.lt.s32.totalorder %s11, 3
    %p169 = pnand %p167, %p168
    %p170 = pneg %p169
    // Predicated region
    $region25: #{sparse_conv_block.2} parent=5 // pred_check
      _
    $region26: #{sparse_conv_block.2} parent=5 // pred_check_branch
      %172 = sbr.rel (%p169) target = $region28
    $region27: #{sparse_conv_block.2} parent=5 // pred_region
      %s173 = ssub.s32 %s11, 1
      %s174 = smul.u32 4, %s16
      %p175 = scmp.lt.s32.totalorder %s174, 7
      %s176 = scalar_select %p175, %s174, 7
      %s177 = smul.addr %s176, 4
      %s178 = scalar_lea.vmem %s0, %s177
      %p179 = pneg %p37
      %p180 = pneg %p34
      %p181 = pneg %p58
      %p182 = pneg %p55
      %p183 = pneg %p84
      %p184 = pneg %p81
      %s185 = smul.u32 4, %s16
      %p186 = scmp.lt.s32.totalorder %s185, 7
      %s187 = scalar_select %p186, %s185, 7
      %s188 = smul.addr %s187, 8
      %s189 = scalar_lea.vmem %s2, %s188
      %p190 = pneg %p110
      %p191 = pneg %p107
      %p192 = scmp.lt.s32.totalorder %s16, 1
      %s193 = scalar_select %p192, %s16, 1
      %s194 = scalar_lea.vmem %s3, %s193
      %p195 = pneg %p136
      %p196 = pneg %p133
      %p197 = scmp.lt.s32.totalorder %s16, 1
      %s198 = scalar_select %p197, %s16, 1
      %s199 = scalar_lea.vmem %s4, %s198
      %s200 = smul.u32 4, %s16
      %p201 = scmp.lt.s32.totalorder %s200, 7
      %s202 = scalar_select %p201, %s200, 7
      %s203 = smul.addr %s202, 4
      %s204 = scalar_lea.vmem %s0, %s203
      %s205 = smul.u32 4, %s16
      %s206 = smul.u32 4, %s16
      %p207 = scmp.lt.s32.totalorder %s206, 7
      %s208 = scalar_select %p207, %s206, 7
      %s209 = smul.addr %s208, 8
      %s210 = scalar_lea.vmem %s2, %s209
      %s211 = smul.u32 4, %s16
      %p212 = scmp.lt.s32.totalorder %s16, 1
      %s213 = scalar_select %p212, %s16, 1
      %s214 = scalar_lea.vmem %s3, %s213
      %p215 = scmp.lt.s32.totalorder %s16, 1
      %s216 = scalar_select %p215, %s16, 1
      %s217 = scalar_lea.vmem %s4, %s216
      %v218 = vld [vmem:[%s204] sm:$0xf]
      %v219 = vld [vmem:[%s204 + $0x4] sm:$0xf]
      %v220 = vld [vmem:[%s204 + $0x8] sm:$0xf]
      %v221 = vld [vmem:[%s204 + $0xc] sm:$0xf]
      %v222 = vld [vmem:[%s1] sm:$0xf]
      %v223 = vld [vmem:[%s1 + $0x4] sm:$0xf]
      %v224 = vld [vmem:[%s1 + $0x8] sm:$0xf]
      %v225 = vld [vmem:[%s1 + $0xc] sm:$0xf]
      %v226 = vld [vmem:[%s1 + $0x10] sm:$0xf]
      %v227 = vld [vmem:[%s1 + $0x14] sm:$0xf]
      %v228 = vld [vmem:[%s1 + $0x18] sm:$0xf]
      %v229 = vld [vmem:[%s1 + $0x1c] sm:$0xf]
      %v230 = vld [vmem:[%s1 + $0x20] sm:$0xf]
      %v231 = vld [vmem:[%s1 + $0x24] sm:$0xf]
      %v232 = vld [vmem:[%s1 + $0x28] sm:$0xf]
      %v233 = vld [vmem:[%s1 + $0x2c] sm:$0xf]
      %v234 = vld [vmem:[%s1 + $0x30] sm:$0xf]
      %v235 = vld [vmem:[%s1 + $0x34] sm:$0xf]
      %v236 = vld [vmem:[%s1 + $0x38] sm:$0xf]
      %v237 = vld [vmem:[%s1 + $0x3c] sm:$0xf]
      %v242 = vunpack.c.l.b16 %v218
      %v243 = vunpack.c.l.b16 %v219
      %v244 = vunpack.c.l.b16 %v220
      %v245 = vunpack.c.l.b16 %v221
      %v246 = vpack.c.b16 %v243, %v242
      %v247 = vpack.c.b16 %v245, %v244
      %v266 = vunpack.c.l.b16 %v222
      %v267 = vunpack.c.l.b16 %v223
      %v268 = vunpack.c.l.b16 %v224
      %v269 = vunpack.c.l.b16 %v225
      %v270 = vunpack.c.l.b16 %v226
      %v271 = vunpack.c.l.b16 %v227
      %v272 = vunpack.c.l.b16 %v228
      %v273 = vunpack.c.l.b16 %v229
      %v274 = vunpack.c.l.b16 %v230
      %v275 = vunpack.c.l.b16 %v231
      %v276 = vunpack.c.l.b16 %v232
      %v277 = vunpack.c.l.b16 %v233
      %v278 = vunpack.c.l.b16 %v234
      %v279 = vunpack.c.l.b16 %v235
      %v280 = vunpack.c.l.b16 %v236
      %v281 = vunpack.c.l.b16 %v237
      %v282 = vpack.c.b16 %v267, %v266
      %v283 = vpack.c.b16 %v269, %v268
      %v284 = vpack.c.b16 %v271, %v270
      %v285 = vpack.c.b16 %v273, %v272
      %v286 = vpack.c.b16 %v275, %v274
      %v287 = vpack.c.b16 %v277, %v276
      %v288 = vpack.c.b16 %v279, %v278
      %v289 = vpack.c.b16 %v281, %v280
      %298 = vmatpush.bf16.msra.mxu0 %v289
      %299 = vmatpush.bf16.msra.mxu0 %v288
      %300 = vmatpush.bf16.msra.mxu0 %v287
      %301 = vmatpush.bf16.msra.mxu0 %v286
      %302 = vmatpush.bf16.msra.mxu0 %v285
      %303 = vmatpush.bf16.msra.mxu0 %v284
      %304 = vmatpush.bf16.msra.mxu0 %v283
      %305 = vmatpush.bf16.msra.mxu0 %v282
      %306 = vmatmul.bf16.gmra.mxu0 %v246
      %v307 = vpop.f32.mrf.mxu0
      %v308 = vadd.f32 0.0, %v307
      %v309 = vpop.f32.mrf.mxu0
      %v310 = vadd.f32 0.0, %v309
      %311 = vmatmul.bf16.gmra.mxu0 %v247
      %v312 = vpop.f32.mrf.mxu0
      %v313 = vadd.f32 0.0, %v312
      %v314 = vpop.f32.mrf.mxu0
      %v315 = vadd.f32 0.0, %v314
      %316 = vdwg.mxu0
      %vm317 = vcmask 64512
      %318 = vst.msk [vmem:[%s210] sm:$0xff] %vm317, %v308
      %319 = vst.msk [vmem:[%s210 + $0x8] sm:$0xff] %vm317, %v310
      %320 = vst.msk [vmem:[%s210 + $0x10] sm:$0xff] %vm317, %v313
      %321 = vst.msk [vmem:[%s210 + $0x18] sm:$0xff] %vm317, %v315
      %v322 = vsel %vm317, %v308, 0.0
      %v323 = vsel %vm317, %v310, 0.0
      %v324 = vadd.f32 %v322, %v323
      %v325 = vsel %vm317, %v313, 0.0
      %v326 = vadd.f32 %v324, %v325
      %v327 = vsel %vm317, %v315, 0.0
      %v328 = vadd.f32 %v326, %v327
      %v329 = vrot.slane %v328, 4
      %v330 = vadd.f32 %v328, %v329
      %v331 = vrot.slane %v330, 2
      %v332 = vadd.f32 %v330, %v331
      %v333 = vrot.slane %v332, 1
      %v334 = vadd.f32 %v332, %v333
      %vm335 = vcmask 57344
      %336 = vst.msk [vmem:[%s214] sm:$0x1] %vm335, %v334
      %v337 = vmul.f32 %v308, %v308
      %v338 = vmul.f32 %v310, %v310
      %v339 = vmul.f32 %v313, %v313
      %v340 = vmul.f32 %v315, %v315
      %v341 = vsel %vm317, %v337, 0.0
      %v342 = vsel %vm317, %v338, 0.0
      %v343 = vadd.f32 %v341, %v342
      %v344 = vsel %vm317, %v339, 0.0
      %v345 = vadd.f32 %v343, %v344
      %v346 = vsel %vm317, %v340, 0.0
      %v347 = vadd.f32 %v345, %v346
      %v348 = vrot.slane %v347, 4
      %v349 = vadd.f32 %v347, %v348
      %v350 = vrot.slane %v349, 2
      %v351 = vadd.f32 %v349, %v350
      %v352 = vrot.slane %v351, 1
      %v353 = vadd.f32 %v351, %v352
      %354 = vst.msk [vmem:[%s217] sm:$0x1] %vm335, %v353
      %s355 = smul.u32 4, %s16
      %p356 = scmp.lt.s32.totalorder %s355, 7
      %s357 = scalar_select %p356, %s355, 7
      %s358 = smul.addr %s357, 8
      %s359 = scalar_lea.vmem %s2, %s358
      %p360 = scmp.lt.s32.totalorder %s16, 1
      %s361 = scalar_select %p360, %s16, 1
      %s362 = scalar_lea.vmem %s3, %s361
      %p363 = scmp.lt.s32.totalorder %s16, 1
      %s364 = scalar_select %p363, %s16, 1
      %s365 = scalar_lea.vmem %s4, %s364
      // Predicated region
      $region29: #{sparse_conv_block.2} parent=27 // pred_check
        %p366 = pneg %p81
      $region30: #{sparse_conv_block.2} parent=27 // pred_check_branch
        %368 = sbr.rel (%p366) target = $region32
      $region31: #{sparse_conv_block.2} parent=27 // pred_region
        %s369 = smul.u32 4, %s16
      $region32: #{sparse_conv_block.2} parent=27 // pred_fallthru
        _
      // Predicated region
      $region33: #{sparse_conv_block.2} parent=27 // pred_check
        %p370 = pneg %p107
      $region34: #{sparse_conv_block.2} parent=27 // pred_check_branch
        %372 = sbr.rel (%p370) target = $region36
      $region35: #{sparse_conv_block.2} parent=27 // pred_region
        _
      $region36: #{sparse_conv_block.2} parent=27 // pred_fallthru
        _
      // Predicated region
      $region37: #{sparse_conv_block.2} parent=27 // pred_check
        %p373 = pneg %p133
      $region38: #{sparse_conv_block.2} parent=27 // pred_check_branch
        %375 = sbr.rel (%p373) target = $region40
      $region39: #{sparse_conv_block.2} parent=27 // pred_region
        _
      $region40: #{sparse_conv_block.2} parent=27 // pred_fallthru
        _
    $region28: #{sparse_conv_block.2} parent=5 // pred_fallthru
      _
    %p376 = scmp.le.s32.totalorder 2, %s11
    // Predicated region
    $region41: #{sparse_conv_block.2} parent=5 // pred_check
      %p377 = pneg %p376
    $region42: #{sparse_conv_block.2} parent=5 // pred_check_branch
      %379 = sbr.rel (%p377) target = $region44
    $region43: #{sparse_conv_block.2} parent=5 // pred_region
      %s380 = ssub.s32 %s11, 2
      // Predicated region
      $region45: #{sparse_conv_block.2} parent=43 // pred_check
        %p381 = pneg %p87
      $region46: #{sparse_conv_block.2} parent=43 // pred_check_branch
        %383 = sbr.rel (%p381) target = $region48
      $region47: #{sparse_conv_block.2} parent=43 // pred_region
        %s384 = smul.u32 4, %s17
        %p385 = scmp.lt.s32.totalorder %s384, 7
        %s386 = scalar_select %p385, %s384, 7
        %s387 = smul.addr %s386, 8
        %s388 = scalar_lea.vmem %s2, %s387
      $region48: #{sparse_conv_block.2} parent=43 // pred_fallthru
        _
      // Predicated region
      $region49: #{sparse_conv_block.2} parent=43 // pred_check
        %p389 = pneg %p113
      $region50: #{sparse_conv_block.2} parent=43 // pred_check_branch
        %391 = sbr.rel (%p389) target = $region52
      $region51: #{sparse_conv_block.2} parent=43 // pred_region
        %p392 = scmp.lt.s32.totalorder %s17, 1
        %s393 = scalar_select %p392, %s17, 1
        %s394 = scalar_lea.vmem %s3, %s393
      $region52: #{sparse_conv_block.2} parent=43 // pred_fallthru
        _
      // Predicated region
      $region53: #{sparse_conv_block.2} parent=43 // pred_check
        %p395 = pneg %p139
      $region54: #{sparse_conv_block.2} parent=43 // pred_check_branch
        %397 = sbr.rel (%p395) target = $region56
      $region55: #{sparse_conv_block.2} parent=43 // pred_region
        %p398 = scmp.lt.s32.totalorder %s17, 1
        %s399 = scalar_select %p398, %s17, 1
        %s400 = scalar_lea.vmem %s4, %s399
      $region56: #{sparse_conv_block.2} parent=43 // pred_fallthru
        _
    $region44: #{sparse_conv_block.2} parent=5 // pred_fallthru
      _
  $region6: #{sparse_conv_block.2} parent=0 // loop_footer
    %s15 = sadd.s32 1, %s11
  $region7: #{sparse_conv_block.2} parent=0 // loop_footer_branch
    %10 = sbr.rel target = $region3
  $region8: #{sparse_conv_block.2} parent=0 // loop_exit
    _

// kernel: sparse_conv_block.3
$region0: #{sparse_conv_block.3}
  #allocation0 [shape = 'u32[]', space=smem, size = 0x4, offset = 0x4, fixed_abs, tag = 'smem constant byte address 0x4 - core index']
  #allocation1 [shape = 'u32[72,128]{1,0:T(1,128)}', space=vmem, size = 0x9000, scoped, tag = 'internal scratch']
  #allocation2 [shape = 'f32[1]{0:T(128)S(6)}', space=smem, size = 0x200, scoped, tag = 'scoped memory for sparse_conv_block.3']
  %s0 = inlined_call_operand.<no memory space> [shape: f32[1], index: 0, kind: input, shape index: {}]
  %s1 = inlined_call_operand.vmem [shape: f32[1,8], index: 1, kind: input, shape index: {}]
  %s2 = inlined_call_operand.vmem [shape: f32[1,8], index: 2, kind: input, shape index: {}]
  %s3 = inlined_call_operand.vmem [shape: f32[2,1,8], index: 3, kind: input, shape index: {}]
  %s4 = inlined_call_operand.vmem [shape: f32[2,1,8], index: 4, kind: input, shape index: {}]
  %s5 = inlined_call_operand.vmem [shape: f32[64,8], index: 5, kind: input, shape index: {}]
  %s6 = inlined_call_operand.vmem [shape: f32[64,8], index: 6, kind: output, shape index: {}]
  %s7 = sld [smem:[#allocation0]]
  $region57: #{sparse_conv_block.3} parent=0
    _
  %s9 = ssub.s32 1, %s7
  %s10 = scalar_select 0, %s9, %s7
  %11 = sst [smem:[#allocation2]] %s0
  loop: start=0, step=1, limit=4
  $region2: #{sparse_conv_block.3} parent=0 // loop_pre_header
    _
  $region3: #{sparse_conv_block.3} parent=0 // loop_header
    %s13 = sphi 0, %s17
    %p14 = scmp.ge.s32.totalorder %s13, 4
    %s21 = sphi 0, %s21
    %s23 = sphi 0, %s21
    %s24 = sphi 0, %s23
    %s38 = sphi 0, %s24
    %s42 = sphi 0, %s42
    %s44 = sphi 0, %s42
    %s45 = sphi 0, %s44
    %s59 = sphi 0, %s45
    %s63 = sphi 0, %s63
    %s65 = sphi 0, %s63
    %s66 = sphi 0, %s65
    %s80 = sphi 0, %s66
    %s84 = sphi 0, %s84
    %s86 = sphi 0, %s84
    %s87 = sphi 0, %s86
    %s101 = sphi 0, %s87
    %s105 = sphi 0, %s105
    %s107 = sphi 0, %s105
    %s108 = sphi 0, %s107
    %s122 = sphi 0, %s108
    %s128 = sphi 0, %s130
    %s131 = sphi 0, %s128
    %s132 = sphi 0, %s131
    %s148 = sphi 0, %s132
    %s154 = sphi 0, %s156
    %s157 = sphi 0, %s154
    %s158 = sphi 0, %s157
    %s174 = sphi 0, %s158
  $region4: #{sparse_conv_block.3} parent=0 // loop_header_branch
    %16 = sbr.rel (%p14) target = $region8
  $region5: #{sparse_conv_block.3} parent=0 // loop_body
    %s18 = ssub.s32 %s13, 1
    %s19 = ssub.s32 %s13, 2
    %s20 = sadd.s32 %s13, 1
    %s22 = sadd.s32 %s21, 1
    %p25 = scmp.eq.s32.totalorder %s13, 1
    %p26 = scmp.ne.s32.totalorder %s21, %s23
    %p27 = scmp.eq.s32.totalorder %s13, 0
    %p28 = por %p26, %p27
    %p29 = scmp.ne.s32.totalorder %s21, %s23
    %p30 = scmp.eq.s32.totalorder %s18, 1
    %p31 = por %p29, %p30
    %p32 = scmp.ne.s32.totalorder %s23, %s24
    %p33 = scmp.eq.s32.totalorder %s18, 0
    %p34 = por %p32, %p33
    %p35 = scmp.ne.s32.totalorder %s23, %s24
    %p36 = scmp.eq.s32.totalorder %s19, 1
    %p37 = por %p35, %p36
    %p39 = scmp.ne.s32.totalorder %s24, %s38
    %p40 = scmp.eq.s32.totalorder %s19, 0
    %p41 = por %p39, %p40
    %s43 = sadd.s32 %s42, 1
    %p46 = scmp.eq.s32.totalorder %s13, 1
    %p47 = scmp.ne.s32.totalorder %s42, %s44
    %p48 = scmp.eq.s32.totalorder %s13, 0
    %p49 = por %p47, %p48
    %p50 = scmp.ne.s32.totalorder %s42, %s44
    %p51 = scmp.eq.s32.totalorder %s18, 1
    %p52 = por %p50, %p51
    %p53 = scmp.ne.s32.totalorder %s44, %s45
    %p54 = scmp.eq.s32.totalorder %s18, 0
    %p55 = por %p53, %p54
    %p56 = scmp.ne.s32.totalorder %s44, %s45
    %p57 = scmp.eq.s32.totalorder %s19, 1
    %p58 = por %p56, %p57
    %p60 = scmp.ne.s32.totalorder %s45, %s59
    %p61 = scmp.eq.s32.totalorder %s19, 0
    %p62 = por %p60, %p61
    %s64 = sadd.s32 %s63, 1
    %p67 = scmp.eq.s32.totalorder %s13, 1
    %p68 = scmp.ne.s32.totalorder %s63, %s65
    %p69 = scmp.eq.s32.totalorder %s13, 0
    %p70 = por %p68, %p69
    %p71 = scmp.ne.s32.totalorder %s63, %s65
    %p72 = scmp.eq.s32.totalorder %s18, 1
    %p73 = por %p71, %p72
    %p74 = scmp.ne.s32.totalorder %s65, %s66
    %p75 = scmp.eq.s32.totalorder %s18, 0
    %p76 = por %p74, %p75
    %p77 = scmp.ne.s32.totalorder %s65, %s66
    %p78 = scmp.eq.s32.totalorder %s19, 1
    %p79 = por %p77, %p78
    %p81 = scmp.ne.s32.totalorder %s66, %s80
    %p82 = scmp.eq.s32.totalorder %s19, 0
    %p83 = por %p81, %p82
    %s85 = sadd.s32 %s84, 1
    %p88 = scmp.eq.s32.totalorder %s13, 1
    %p89 = scmp.ne.s32.totalorder %s84, %s86
    %p90 = scmp.eq.s32.totalorder %s13, 0
    %p91 = por %p89, %p90
    %p92 = scmp.ne.s32.totalorder %s84, %s86
    %p93 = scmp.eq.s32.totalorder %s18, 1
    %p94 = por %p92, %p93
    %p95 = scmp.ne.s32.totalorder %s86, %s87
    %p96 = scmp.eq.s32.totalorder %s18, 0
    %p97 = por %p95, %p96
    %p98 = scmp.ne.s32.totalorder %s86, %s87
    %p99 = scmp.eq.s32.totalorder %s19, 1
    %p100 = por %p98, %p99
    %p102 = scmp.ne.s32.totalorder %s87, %s101
    %p103 = scmp.eq.s32.totalorder %s19, 0
    %p104 = por %p102, %p103
    %s106 = sadd.s32 %s105, 1
    %p109 = scmp.eq.s32.totalorder %s13, 1
    %p110 = scmp.ne.s32.totalorder %s105, %s107
    %p111 = scmp.eq.s32.totalorder %s13, 0
    %p112 = por %p110, %p111
    %p113 = scmp.ne.s32.totalorder %s105, %s107
    %p114 = scmp.eq.s32.totalorder %s18, 1
    %p115 = por %p113, %p114
    %p116 = scmp.ne.s32.totalorder %s107, %s108
    %p117 = scmp.eq.s32.totalorder %s18, 0
    %p118 = por %p116, %p117
    %p119 = scmp.ne.s32.totalorder %s107, %s108
    %p120 = scmp.eq.s32.totalorder %s19, 1
    %p121 = por %p119, %p120
    %p123 = scmp.ne.s32.totalorder %s108, %s122
    %p124 = scmp.eq.s32.totalorder %s19, 0
    %p125 = por %p123, %p124
    %s126 = ssub.s32 %s13, %s20
    %p127 = scmp.eq.s32.totalorder %s126, 0
    %s129 = sadd.s32 %s128, 1
    %s130 = scalar_select %p127, %s128, %s129
    %p133 = pneg %p127
    %p134 = scmp.eq.s32.totalorder %s13, 1
    %p135 = por %p133, %p134
    %p136 = scmp.ne.s32.totalorder %s128, %s131
    %p137 = scmp.eq.s32.totalorder %s13, 0
    %p138 = por %p136, %p137
    %p139 = scmp.ne.s32.totalorder %s128, %s131
    %p140 = scmp.eq.s32.totalorder %s18, 1
    %p141 = por %p139, %p140
    %p142 = scmp.ne.s32.totalorder %s131, %s132
    %p143 = scmp.eq.s32.totalorder %s18, 0
    %p144 = por %p142, %p143
    %p145 = scmp.ne.s32.totalorder %s131, %s132
    %p146 = scmp.eq.s32.totalorder %s19, 1
    %p147 = por %p145, %p146
    %p149 = scmp.ne.s32.totalorder %s132, %s148
    %p150 = scmp.eq.s32.totalorder %s19, 0
    %p151 = por %p149, %p150
    %s152 = ssub.s32 %s13, %s20
    %p153 = scmp.eq.s32.totalorder %s152, 0
    %s155 = sadd.s32 %s154, 1
    %s156 = scalar_select %p153, %s154, %s155
    %p159 = pneg %p153
    %p160 = scmp.eq.s32.totalorder %s13, 1
    %p161 = por %p159, %p160
    %p162 = scmp.ne.s32.totalorder %s154, %s157
    %p163 = scmp.eq.s32.totalorder %s13, 0
    %p164 = por %p162, %p163
    %p165 = scmp.ne.s32.totalorder %s154, %s157
    %p166 = scmp.eq.s32.totalorder %s18, 1
    %p167 = por %p165, %p166
    %p168 = scmp.ne.s32.totalorder %s157, %s158
    %p169 = scmp.eq.s32.totalorder %s18, 0
    %p170 = por %p168, %p169
    %p171 = scmp.ne.s32.totalorder %s157, %s158
    %p172 = scmp.eq.s32.totalorder %s19, 1
    %p173 = por %p171, %p172
    %p175 = scmp.ne.s32.totalorder %s158, %s174
    %p176 = scmp.eq.s32.totalorder %s19, 0
    %p177 = por %p175, %p176
    %p178 = scmp.le.s32.totalorder 1, %s13
    %p179 = scmp.lt.s32.totalorder %s13, 3
    %p180 = pnand %p178, %p179
    %p181 = pneg %p180
    // Predicated region
    $region9: #{sparse_conv_block.3} parent=5 // pred_check
      _
    $region10: #{sparse_conv_block.3} parent=5 // pred_check_branch
      %183 = sbr.rel (%p180) target = $region12
    $region11: #{sparse_conv_block.3} parent=5 // pred_region
      %s184 = ssub.s32 %s13, 1
      // Predicated region
      $region13: #{sparse_conv_block.3} parent=11 // pred_check
        %p185 = pneg %p34
      $region14: #{sparse_conv_block.3} parent=11 // pred_check_branch
        %187 = sbr.rel (%p185) target = $region16
      $region15: #{sparse_conv_block.3} parent=11 // pred_region
        _
      $region16: #{sparse_conv_block.3} parent=11 // pred_fallthru
        _
      // Predicated region
      $region17: #{sparse_conv_block.3} parent=11 // pred_check
        %p188 = pneg %p55
      $region18: #{sparse_conv_block.3} parent=11 // pred_check_branch
        %190 = sbr.rel (%p188) target = $region20
      $region19: #{sparse_conv_block.3} parent=11 // pred_region
        _
      $region20: #{sparse_conv_block.3} parent=11 // pred_fallthru
        _
      // Predicated region
      $region21: #{sparse_conv_block.3} parent=11 // pred_check
        %p191 = pneg %p76
      $region22: #{sparse_conv_block.3} parent=11 // pred_check_branch
        %193 = sbr.rel (%p191) target = $region24
      $region23: #{sparse_conv_block.3} parent=11 // pred_region
        _
      $region24: #{sparse_conv_block.3} parent=11 // pred_fallthru
        _
      // Predicated region
      $region25: #{sparse_conv_block.3} parent=11 // pred_check
        %p194 = pneg %p97
      $region26: #{sparse_conv_block.3} parent=11 // pred_check_branch
        %196 = sbr.rel (%p194) target = $region28
      $region27: #{sparse_conv_block.3} parent=11 // pred_region
        _
      $region28: #{sparse_conv_block.3} parent=11 // pred_fallthru
        _
      // Predicated region
      $region29: #{sparse_conv_block.3} parent=11 // pred_check
        %p197 = pneg %p118
      $region30: #{sparse_conv_block.3} parent=11 // pred_check_branch
        %199 = sbr.rel (%p197) target = $region32
      $region31: #{sparse_conv_block.3} parent=11 // pred_region
        _
      $region32: #{sparse_conv_block.3} parent=11 // pred_fallthru
        _
    $region12: #{sparse_conv_block.3} parent=5 // pred_fallthru
      _
    %p200 = scmp.lt.s32.totalorder %s13, 2
    // Predicated region
    $region33: #{sparse_conv_block.3} parent=5 // pred_check
      %p201 = pneg %p200
    $region34: #{sparse_conv_block.3} parent=5 // pred_check_branch
      %203 = sbr.rel (%p201) target = $region36
    $region35: #{sparse_conv_block.3} parent=5 // pred_region
      // Predicated region
      $region37: #{sparse_conv_block.3} parent=35 // pred_check
        %p204 = pneg %p138
      $region38: #{sparse_conv_block.3} parent=35 // pred_check_branch
        %206 = sbr.rel (%p204) target = $region40
      $region39: #{sparse_conv_block.3} parent=35 // pred_region
        %s207 = smul.u32 4, %s13
        %p208 = scmp.lt.s32.totalorder %s207, 7
        %s209 = scalar_select %p208, %s207, 7
        %s210 = smul.addr %s209, 8
        %s211 = scalar_lea.vmem %s5, %s210
        %s212 = smul.u32 4, %s13
      $region40: #{sparse_conv_block.3} parent=35 // pred_fallthru
        _
    $region36: #{sparse_conv_block.3} parent=5 // pred_fallthru
      _
    %p213 = scmp.le.s32.totalorder 1, %s13
    %p214 = scmp.lt.s32.totalorder %s13, 3
    %p215 = pnand %p213, %p214
    %p216 = pneg %p215
    // Predicated region
    $region41: #{sparse_conv_block.3} parent=5 // pred_check
      _
    $region42: #{sparse_conv_block.3} parent=5 // pred_check_branch
      %218 = sbr.rel (%p215) target = $region44
    $region43: #{sparse_conv_block.3} parent=5 // pred_region
      %s219 = ssub.s32 %s13, 1
      %p220 = pneg %p34
      %p221 = pneg %p31
      %p222 = pneg %p55
      %p223 = pneg %p52
      %p224 = pneg %p76
      %p225 = pneg %p73
      %p226 = pneg %p97
      %p227 = pneg %p94
      %p228 = pneg %p118
      %p229 = pneg %p115
      %s230 = smul.u32 4, %s18
      %p231 = scmp.lt.s32.totalorder %s230, 7
      %s232 = scalar_select %p231, %s230, 7
      %s233 = smul.addr %s232, 8
      %s234 = scalar_lea.vmem %s5, %s233
      %p235 = pneg %p144
      %p236 = pneg %p141
      %p237 = pneg %p170
      %p238 = pneg %p167
      %s239 = smul.u32 4, %s18
      %p240 = scmp.lt.s32.totalorder %s239, 7
      %s241 = scalar_select %p240, %s239, 7
      %s242 = smul.addr %s241, 8
      %s243 = scalar_lea.vmem %s6, %s242
      %s244 = smul.u32 4, %s18
      %p245 = scmp.lt.s32.totalorder %s244, 7
      %s246 = scalar_select %p245, %s244, 7
      %s247 = smul.addr %s246, 8
      %s248 = scalar_lea.vmem %s5, %s247
      %s249 = smul.u32 4, %s18
      %s250 = smul.u32 4, %s18
      %p251 = scmp.lt.s32.totalorder %s250, 7
      %s252 = scalar_select %p251, %s250, 7
      %s253 = smul.addr %s252, 8
      %s254 = scalar_lea.vmem %s6, %s253
      %s255 = smul.u32 4, %s18
      %s256 = sld [smem:[#allocation2]]
      %s257 = smax.f32 %s256, 1.0
      %v258 = vstv %s257
      %v259 = vrcp.pop %v258
      %v260 = vmul.f32 %v258, %v259
      %v261 = vsub.f32 1.0, %v260
      %v262 = vmul.f32 %v259, %v261
      %v263 = vadd.f32 %v259, %v262
      %vm264 = vweird.f32 %v258
      %vm265 = vweird.f32 %v259
      %vm266 = vmor %vm264, %vm265
      %v267 = vsel %vm266, %v259, %v263
      %v268 = vand.u32 2147483647, %v258
      %vm269 = vcmp.eq.f32.partialorder %v268, 8.507059e+37
      %v270 = vand.u32 %v258, 2147483648
      %v271 = vor.u32 1.1754944e-38, %v270
      %v272 = vsel %vm269, %v271, %v267
      %s273 = vtos %v272
      %v274 = vld [vmem:[%s3] sm:$0x1]
      %v275 = vld [vmem:[%s3 + $0x1] sm:$0x1]
      %vm276 = vcmask 57344
      %v277 = vsel %vm276, %v274, 0.0
      %v278 = vsel %vm276, %v275, 0.0
      %v279 = vadd.f32 %v277, %v278
      %v280 = vstv %s273
      %v281 = vmul.f32 %v279, %v280
      %v282 = vld [vmem:[%s4] sm:$0x1]
      %v283 = vld [vmem:[%s4 + $0x1] sm:$0x1]
      %v284 = vsel %vm276, %v282, 0.0
      %v285 = vsel %vm276, %v283, 0.0
      %v286 = vadd.f32 %v284, %v285
      %v287 = vmul.f32 %v286, %v280
      %v288 = vmul.f32 %v281, %v281
      %v289 = vsub.f32 %v287, %v288
      %v290 = vld [vmem:[%s1] sm:$0x1]
      %v291 = vadd.f32 %v289, 1e-05
      %v292 = vrsqrt.pop %v291
      %v293 = vmul.f32 %v292, %v291
      %v294 = vmul.f32 %v293, %v292
      %v295 = vmul.f32 0.5, %v294
      %v296 = vsub.f32 1.5, %v295
      %v297 = vmul.f32 %v292, %v296
      %vm298 = vweird.f32 %v291
      %vm299 = vweird.f32 %v292
      %vm300 = vmor %vm298, %vm299
      %v301 = vsel %vm300, %v292, %v297
      %v302 = vmul.f32 %v290, %v301
      %v303 = vld [vmem:[%s2] sm:$0x1]
      %v304 = vmul.f32 %v281, %v302
      %v305 = vsub.f32 %v303, %v304
      %v306 = vld [vmem:[%s248] sm:$0xff]
      %v307 = vld [vmem:[%s248 + $0x8] sm:$0xff]
      %v308 = vld [vmem:[%s248 + $0x10] sm:$0xff]
      %v309 = vld [vmem:[%s248 + $0x18] sm:$0xff]
      %v311 = vperm.slane %v302, 0
      %v313 = vmul.f32 %v306, %v311
      %v314 = vmul.f32 %v307, %v311
      %v315 = vmul.f32 %v308, %v311
      %v316 = vmul.f32 %v309, %v311
      %v318 = vperm.slane %v305, 0
      %v320 = vadd.f32 %v313, %v318
      %v321 = vadd.f32 %v314, %v318
      %v322 = vadd.f32 %v315, %v318
      %v323 = vadd.f32 %v316, %v318
      %vm324 = vcmp.gt.f32.partialorder %v320, 0.0
      %vm325 = vcmp.gt.f32.partialorder %v321, 0.0
      %vm326 = vcmp.gt.f32.partialorder %v322, 0.0
      %vm327 = vcmp.gt.f32.partialorder %v323, 0.0
      %v328 = vmul.f32 %v320, 0.01
      %v329 = vmul.f32 %v321, 0.01
      %v330 = vmul.f32 %v322, 0.01
      %v331 = vmul.f32 %v323, 0.01
      %v332 = vsel %vm324, %v320, %v328
      %v333 = vsel %vm325, %v321, %v329
      %v334 = vsel %vm326, %v322, %v330
      %v335 = vsel %vm327, %v323, %v331
      %vm336 = vcmask 64512
      %337 = vst.msk [vmem:[%s254] sm:$0xff] %vm336, %v332
      %338 = vst.msk [vmem:[%s254 + $0x8] sm:$0xff] %vm336, %v333
      %339 = vst.msk [vmem:[%s254 + $0x10] sm:$0xff] %vm336, %v334
      %340 = vst.msk [vmem:[%s254 + $0x18] sm:$0xff] %vm336, %v335
      %s341 = smul.u32 4, %s18
      %p342 = scmp.lt.s32.totalorder %s341, 7
      %s343 = scalar_select %p342, %s341, 7
      %s344 = smul.addr %s343, 8
      %s345 = scalar_lea.vmem %s6, %s344
      // Predicated region
      $region45: #{sparse_conv_block.3} parent=43 // pred_check
        %p346 = pneg %p167
      $region46: #{sparse_conv_block.3} parent=43 // pred_check_branch
        %348 = sbr.rel (%p346) target = $region48
      $region47: #{sparse_conv_block.3} parent=43 // pred_region
        %s349 = smul.u32 4, %s18
      $region48: #{sparse_conv_block.3} parent=43 // pred_fallthru
        _
    $region44: #{sparse_conv_block.3} parent=5 // pred_fallthru
      _
    %p350 = scmp.le.s32.totalorder 2, %s13
    // Predicated region
    $region49: #{sparse_conv_block.3} parent=5 // pred_check
      %p351 = pneg %p350
    $region50: #{sparse_conv_block.3} parent=5 // pred_check_branch
      %353 = sbr.rel (%p351) target = $region52
    $region51: #{sparse_conv_block.3} parent=5 // pred_region
      %s354 = ssub.s32 %s13, 2
      // Predicated region
      $region53: #{sparse_conv_block.3} parent=51 // pred_check
        %p355 = pneg %p173
      $region54: #{sparse_conv_block.3} parent=51 // pred_check_branch
        %357 = sbr.rel (%p355) target = $region56
      $region55: #{sparse_conv_block.3} parent=51 // pred_region
        %s358 = smul.u32 4, %s19
        %p359 = scmp.lt.s32.totalorder %s358, 7
        %s360 = scalar_select %p359, %s358, 7
        %s361 = smul.addr %s360, 8
        %s362 = scalar_lea.vmem %s6, %s361
      $region56: #{sparse_conv_block.3} parent=51 // pred_fallthru
        _
    $region52: #{sparse_conv_block.3} parent=5 // pred_fallthru
      _
  $region6: #{sparse_conv_block.3} parent=0 // loop_footer
    %s17 = sadd.s32 1, %s13
  $region7: #{sparse_conv_block.3} parent=0 // loop_footer_branch
    %12 = sbr.rel target = $region3
  $region8: #{sparse_conv_block.3} parent=0 // loop_exit
    _

</llo_original>
